<compile_context>
chip_gen: v5e
topology: v5e:2x2
jax: 0.10.0
libtpu: 0.0.40
codegen_flags: <defaults>
</compile_context>

<pallas_src>
import functools

import jax
import jax.numpy as jnp
from jax import lax
from jax.experimental import pallas as pl
from jax.experimental.pallas import tpu as pltpu

BN_EPS = 1e-5
_STEP_OVERHEAD_BYTES = 350_000   # ~0.35 us per grid step at ~1 TB/s HBM


def _round_up(x, m):
    return ((x + m - 1) // m) * m


def _vmem_limit_bytes():
    """Scoped VMEM limit: ~3/4 of physical capacity, clamped to [32, 96] MiB."""
    try:
        cap = int(pltpu.get_tpu_info().vmem_capacity_bytes)
    except Exception:
        cap = 64 * 1024 * 1024               # v7x-sized conservative fallback
    return max(32 * 1024 * 1024, min(3 * cap // 4, 96 * 1024 * 1024))


def _pick_hw_tile(hw, buf_bytes_per_lane, traffic_bytes_per_lane, budget):
    """Pick the spatial (lane) tile.

    Chooses the multiple-of-128 tile minimizing
        padded_lanes * traffic_bytes_per_lane + grid_steps * step_overhead
    subject to the double-buffered VMEM budget; H*W is then padded up to a
    multiple of the chosen tile (never falls back to 128 just because nothing
    divides)."""
    hwp128 = _round_up(hw, 128)
    max_tile = max(128, min((budget // buf_bytes_per_lane) // 128 * 128, hwp128))
    best_t, best_cost = 128, None
    for t in range(128, max_tile + 1, 128):
        padded = _round_up(hwp128, t)
        cost = padded * traffic_bytes_per_lane + (padded // t) * _STEP_OVERHEAD_BYTES
        if best_cost is None or cost < best_cost:
            best_t, best_cost = t, cost
    return best_t, _round_up(hwp128, best_t)


# ----------------------------- kernels --------------------------------------

def _stats_kernel(x_ref, w_ref, sum_ref, sq_ref):
    # x: (Cin_p, hw_tile) compute dtype; w: (Cout_p, Cin_p) compute dtype.
    # sum/sq: (Cout_p, 1) f32 per-batch resident accumulators.
    @pl.when(pl.program_id(1) == 0)
    def _init():
        sum_ref[...] = jnp.zeros_like(sum_ref)
        sq_ref[...] = jnp.zeros_like(sq_ref)

    y = jnp.dot(w_ref[...], x_ref[...], preferred_element_type=jnp.float32)
    sum_ref[...] += jnp.sum(y, axis=1, keepdims=True)
    sq_ref[...] += jnp.sum(y * y, axis=1, keepdims=True)


def _conv_stats_kernel(x_ref, w_ref, y_ref, sum_ref, sq_ref):
    # Fused path pass 1: also stores the pre-BN y tile (lane-dense, f32).
    @pl.when(pl.program_id(1) == 0)
    def _init():
        sum_ref[...] = jnp.zeros_like(sum_ref)
        sq_ref[...] = jnp.zeros_like(sq_ref)

    y = jnp.dot(w_ref[...], x_ref[...], preferred_element_type=jnp.float32)
    y_ref[...] = y
    sum_ref[...] += jnp.sum(y, axis=1, keepdims=True)
    sq_ref[...] += jnp.sum(y * y, axis=1, keepdims=True)


def _conv_bn_relu_kernel(x_ref, w_ref, scale_ref, shift_ref, o_ref):
    # Recompute path pass 2: y = W @ x, folded BN scale/shift, ReLU.
    y = jnp.dot(w_ref[...], x_ref[...], preferred_element_type=jnp.float32)
    o_ref[...] = jnp.maximum(y * scale_ref[...] + shift_ref[...],
                             0.0).astype(o_ref.dtype)


def _bn_relu_kernel(y_ref, scale_ref, shift_ref, o_ref):
    # Fused path pass 2: in-place folded BN + ReLU over the stored y buffer.
    o_ref[...] = jnp.maximum(y_ref[...] * scale_ref[...] + shift_ref[...],
                             0.0).astype(o_ref.dtype)


# ----------------------------- wrapper ---------------------------------------

@functools.partial(jax.jit, static_argnames=("compute_dtype",))
def conv1x1_module(x_nchw, conv_w, gamma, beta, *, compute_dtype=jnp.float32):
    """Forward pass of the conv1x1 module (Conv2d 1x1 no-bias -> BN -> ReLU).

    x_nchw: (N, Cin, H, W) f32; conv_w: (Cout, Cin, 1, 1) f32;
    gamma, beta: (Cout,) f32.  Returns (N, Cout, H, W) f32.
    """
    n, cin, h, w = x_nchw.shape
    cout = conv_w.shape[0]
    hw = h * w
    m = n * hw                                  # true BN element count / channel

    xb = jnp.dtype(compute_dtype).itemsize
    cin_sub = max(8, 32 // xb)                  # f32 sublane tile 8, bf16 16
    cin_p = _round_up(cin, cin_sub)
    cout_p = _round_up(cout, 8)                 # y / output stay f32

    vmem_limit = _vmem_limit_bytes()
    # double-buffered x tile + double-buffered f32 y/out tile + in-kernel f32 y
    buf_lane = 2 * cin_p * xb + 3 * cout_p * 4
    traffic_lane = 2 * cin_p * xb + 2 * cout_p * 4
    hw_tile, hwp = _pick_hw_tile(hw, buf_lane, traffic_lane, vmem_limit // 3)

    fused = cin > 2 * cout                      # DenseNet bottleneck: conv once

    # ---- operand prep (no materialized copies when no padding is needed) ----
    x3d = x_nchw.reshape(n, cin, hw).astype(compute_dtype)
    if cin_p != cin or hwp != hw:               # zero pad contributes 0 to sums
        x3d = jnp.pad(x3d, ((0, 0), (0, cin_p - cin), (0, hwp - hw)))

    w2d = conv_w.reshape(cout, cin).astype(compute_dtype)
    if cout_p != cout or cin_p != cin:
        w2d = jnp.pad(w2d, ((0, cout_p - cout), (0, cin_p - cin)))
    gamma_p = gamma.astype(jnp.float32)
    beta_p = beta.astype(jnp.float32)
    if cout_p != cout:
        gamma_p = jnp.pad(gamma_p, (0, cout_p - cout))
        beta_p = jnp.pad(beta_p, (0, cout_p - cout))

    grid = (n, hwp // hw_tile)
    matmul_flops = 2 * n * hwp * cin_p * cout_p
    x_bytes = xb * n * cin_p * hwp
    w_bytes = xb * cout_p * cin_p
    y_bytes = 4 * n * cout_p * hwp

    x_spec = pl.BlockSpec((None, cin_p, hw_tile), lambda b, t: (b, 0, t))
    w_spec = pl.BlockSpec((cout_p, cin_p), lambda b, t: (0, 0))
    vec_spec = pl.BlockSpec((cout_p, 1), lambda b, t: (0, 0))
    y_spec = pl.BlockSpec((None, cout_p, hw_tile), lambda b, t: (b, 0, t))
    stat_spec = pl.BlockSpec((None, cout_p, 1), lambda b, t: (b, 0, 0))
    stat_shape = jax.ShapeDtypeStruct((n, cout_p, 1), jnp.float32)

    stats_params = pltpu.CompilerParams(
        dimension_semantics=("parallel", "arbitrary"),   # batch split on v7x
        vmem_limit_bytes=vmem_limit)
    apply_params = pltpu.CompilerParams(
        dimension_semantics=("parallel", "parallel"),
        vmem_limit_bytes=vmem_limit)

    # ---- pass 1: y = W @ x; per-batch partial sum / sum-of-squares ----------
    if fused:
        y3d, psum, psq = pl.pallas_call(
            _conv_stats_kernel,
            out_shape=(jax.ShapeDtypeStruct((n, cout_p, hwp), jnp.float32),
                       stat_shape, stat_shape),
            grid_spec=pltpu.PrefetchScalarGridSpec(
                num_scalar_prefetch=0, grid=grid,
                in_specs=[x_spec, w_spec],
                out_specs=[y_spec, stat_spec, stat_spec]),
            compiler_params=stats_params,
            cost_estimate=pl.CostEstimate(
                flops=matmul_flops + 3 * n * hwp * cout_p,
                transcendentals=0,
                bytes_accessed=x_bytes + w_bytes + y_bytes),
        )(x3d, w2d)
    else:
        psum, psq = pl.pallas_call(
            _stats_kernel,
            out_shape=(stat_shape, stat_shape),
            grid_spec=pltpu.PrefetchScalarGridSpec(
                num_scalar_prefetch=0, grid=grid,
                in_specs=[x_spec, w_spec],
                out_specs=[stat_spec, stat_spec]),
            compiler_params=stats_params,
            cost_estimate=pl.CostEstimate(
                flops=matmul_flops + 3 * n * hwp * cout_p,
                transcendentals=0,
                bytes_accessed=x_bytes + w_bytes + 8 * n * cout_p),
        )(x3d, w2d)

    # Fold training-mode (biased) batch statistics into per-channel scale/shift.
    col_sum = jnp.sum(psum, axis=0)                            # (Cout_p, 1)
    col_sq = jnp.sum(psq, axis=0)
    mean = col_sum / m
    var = jnp.maximum(col_sq / m - mean * mean, 0.0)           # guard cancellation
    inv_std = lax.rsqrt(var + BN_EPS)
    scale = gamma_p.reshape(cout_p, 1) * inv_std
    shift = beta_p.reshape(cout_p, 1) - mean * scale

    # ---- pass 2: folded BN + ReLU, lane-dense f32 output ---------------------
    if fused:
        out3d = pl.pallas_call(
            _bn_relu_kernel,
            out_shape=jax.ShapeDtypeStruct((n, cout_p, hwp), jnp.float32),
            grid_spec=pltpu.PrefetchScalarGridSpec(
                num_scalar_prefetch=0, grid=grid,
                in_specs=[y_spec, vec_spec, vec_spec],
                out_specs=y_spec),
            compiler_params=apply_params,
            input_output_aliases={0: 0},        # in-place over the y buffer
            cost_estimate=pl.CostEstimate(
                flops=3 * n * hwp * cout_p,
                transcendentals=0,
                bytes_accessed=2 * y_bytes),
        )(y3d, scale, shift)
    else:
        out3d = pl.pallas_call(
            _conv_bn_relu_kernel,
            out_shape=jax.ShapeDtypeStruct((n, cout_p, hwp), jnp.float32),
            grid_spec=pltpu.PrefetchScalarGridSpec(
                num_scalar_prefetch=0, grid=grid,
                in_specs=[x_spec, w_spec, vec_spec, vec_spec],
                out_specs=y_spec),
            compiler_params=apply_params,
            cost_estimate=pl.CostEstimate(
                flops=matmul_flops + 3 * n * hwp * cout_p,
                transcendentals=0,
                bytes_accessed=x_bytes + w_bytes + y_bytes),
        )(x3d, w2d, scale, shift)

    if cout_p != cout or hwp != hw:
        out3d = out3d[:, :cout, :hw]
    return out3d.reshape(n, cout, h, w)


# ----------------------------- test harness ----------------------------------

def _reference(x, conv_w, gamma, beta):
    cout, cin = conv_w.shape[0], conv_w.shape[1]
    y = jnp.einsum("nchw,oc->nohw", x, conv_w.reshape(cout, cin),
                   precision=lax.Precision.HIGHEST)
    mean = jnp.mean(y, axis=(0, 2, 3), keepdims=True)
    var = jnp.mean((y - mean) ** 2, axis=(0, 2, 3), keepdims=True)
    return jnp.maximum((y - mean) * lax.rsqrt(var + BN_EPS)
                       * gamma.reshape(1, cout, 1, 1)
                       + beta.reshape(1, cout, 1, 1), 0.0)


if __name__ == "__main__":
    key = jax.random.PRNGKey(0)
    kx, kw, kx2, kw2, kg2, kb2 = jax.random.split(key, 6)

    # ---- recompute path (Cout >= Cin/2): batch=2, Cin=4, Cout=8, 16x16 ------
    N, CIN, COUT, H, W = 2, 4, 8, 16, 16
    x = jax.random.normal(kx, (N, CIN, H, W), dtype=jnp.float32)
    conv_w = jax.random.uniform(kw, (COUT, CIN, 1, 1), dtype=jnp.float32,
                                minval=-1.0, maxval=1.0) / jnp.sqrt(jnp.float32(CIN))
    gamma = jnp.ones((COUT,), dtype=jnp.float32)   # BatchNorm2d default affine
    beta = jnp.zeros((COUT,), dtype=jnp.float32)

    out = conv1x1_module(x, conv_w, gamma, beta)
    jax.block_until_ready(out)
    ref = _reference(x, conv_w, gamma, beta)
    assert out.shape == (N, COUT, H, W)
    assert jnp.allclose(out, ref, atol=2e-4, rtol=2e-4)

    # ---- fused path (Cin > 2*Cout): batch=2, Cin=32, Cout=8, 10x10 ----------
    N2, CIN2, COUT2, H2, W2 = 2, 32, 8, 10, 10
    x2 = jax.random.normal(kx2, (N2, CIN2, H2, W2), dtype=jnp.float32)
    conv_w2 = jax.random.uniform(kw2, (COUT2, CIN2, 1, 1), dtype=jnp.float32,
                                 minval=-1.0, maxval=1.0) / jnp.sqrt(jnp.float32(CIN2))
    gamma2 = 1.0 + 0.1 * jax.random.uniform(kg2, (COUT2,), dtype=jnp.float32)
    beta2 = 0.1 * jax.random.normal(kb2, (COUT2,), dtype=jnp.float32)

    out2 = conv1x1_module(x2, conv_w2, gamma2, beta2)
    jax.block_until_ready(out2)
    ref2 = _reference(x2, conv_w2, gamma2, beta2)
    assert out2.shape == (N2, COUT2, H2, W2)
    assert jnp.allclose(out2, ref2, atol=5e-4, rtol=5e-4)

    # ---- bf16 HBM-stream path (v6e/v7x); f32 accumulation + f32 BN math -----
    out_bf16 = conv1x1_module(x, conv_w, gamma, beta,
                              compute_dtype=jnp.bfloat16)
    jax.block_until_ready(out_bf16)
    assert out_bf16.shape == (N, COUT, H, W)
    assert jnp.allclose(out_bf16, ref, atol=5e-2, rtol=5e-2)

    print("KERNEL_OK")
</pallas_src>

<mosaic_0001>
module attributes {stable_mosaic.version = 11 : i64} {
  func.func @_stats_kernel(%arg0: i32, %arg1: i32, %arg2: memref<1x8x256xf32, #tpu.memory_space<vmem>>, %arg3: memref<8x8xf32, #tpu.memory_space<vmem>>, %arg4: memref<1x8x1xf32, #tpu.memory_space<vmem>>, %arg5: memref<1x8x1xf32, #tpu.memory_space<vmem>>) attributes {dimension_semantics = [#tpu.dimension_semantics<parallel>, #tpu.dimension_semantics<arbitrary>], iteration_bounds = array<i64: 2, 1>, scalar_prefetch = 0 : i64, scratch_operands = 0 : i64, tpu.core_type = #tpu.core_type<tc>, window_params = [{transform_indices = @transform_0, window_bounds = array<i64: 1, 8, 256>}, {pipeline_mode = #tpu.pipeline_mode<synchronous>, transform_indices = @transform_1, window_bounds = array<i64: 8, 8>}, {transform_indices = @transform_2, window_bounds = array<i64: 1, 8, 1>}, {transform_indices = @transform_3, window_bounds = array<i64: 1, 8, 1>}]} {
    %c0_i32 = arith.constant 0 : i32
    %0 = arith.cmpi eq, %arg1, %c0_i32 : i32
    %1 = arith.extui %0 : i1 to i32
    %c0_i32_0 = arith.constant 0 : i32
    %2 = arith.cmpi ne, %1, %c0_i32_0 : i32
    scf.if %2 {
      %cst_19 = arith.constant 0.000000e+00 : f32
      %24 = vector.broadcast %cst_19 : f32 to vector<8x1xf32>
      %c0_20 = arith.constant 0 : index
      %c0_21 = arith.constant 0 : index
      %c0_22 = arith.constant 0 : index
      %25 = vector.load %arg4[%c0_20, %c0_21, %c0_22] : memref<1x8x1xf32, #tpu.memory_space<vmem>>, vector<1x8x1xf32>
      %26 = vector.shape_cast %25 : vector<1x8x1xf32> to vector<8x1xf32>
      %27 = vector.shape_cast %24 : vector<8x1xf32> to vector<1x8x1xf32>
      tpu.vector_store %arg4[%c0_20, %c0_21, %c0_22], %27 {strides = array<i32>} : memref<1x8x1xf32, #tpu.memory_space<vmem>>, vector<1x8x1xf32>,
      %cst_23 = arith.constant 0.000000e+00 : f32
      %28 = vector.broadcast %cst_23 : f32 to vector<8x1xf32>
      %c0_24 = arith.constant 0 : index
      %c0_25 = arith.constant 0 : index
      %c0_26 = arith.constant 0 : index
      %29 = vector.load %arg5[%c0_24, %c0_25, %c0_26] : memref<1x8x1xf32, #tpu.memory_space<vmem>>, vector<1x8x1xf32>
      %30 = vector.shape_cast %29 : vector<1x8x1xf32> to vector<8x1xf32>
      %31 = vector.shape_cast %28 : vector<8x1xf32> to vector<1x8x1xf32>
      tpu.vector_store %arg5[%c0_24, %c0_25, %c0_26], %31 {strides = array<i32>} : memref<1x8x1xf32, #tpu.memory_space<vmem>>, vector<1x8x1xf32>,
    } else {
    }
    %c0 = arith.constant 0 : index
    %c0_1 = arith.constant 0 : index
    %3 = vector.load %arg3[%c0, %c0_1] : memref<8x8xf32, #tpu.memory_space<vmem>>, vector<8x8xf32>
    %c0_2 = arith.constant 0 : index
    %c0_3 = arith.constant 0 : index
    %c0_4 = arith.constant 0 : index
    %4 = vector.load %arg2[%c0_2, %c0_3, %c0_4] : memref<1x8x256xf32, #tpu.memory_space<vmem>>, vector<1x8x256xf32>
    %5 = vector.shape_cast %4 : vector<1x8x256xf32> to vector<8x256xf32>
    %cst = arith.constant dense<0.000000e+00> : vector<8x256xf32>
    %6 = tpu.matmul %3, %5, %cst {dimension_numbers = #tpu.dot_dimension_numbers<[1], [0], [0], [1], [0, 0, 1, 1], [], []>} : vector<8x8xf32>, vector<8x256xf32>, vector<8x256xf32> -> vector<8x256xf32>
    %c0_5 = arith.constant 0 : index
    %c0_6 = arith.constant 0 : index
    %c0_7 = arith.constant 0 : index
    %7 = vector.load %arg4[%c0_5, %c0_6, %c0_7] : memref<1x8x1xf32, #tpu.memory_space<vmem>>, vector<1x8x1xf32>
    %8 = vector.shape_cast %7 : vector<1x8x1xf32> to vector<8x1xf32>
    %cst_8 = arith.constant dense<0.000000e+00> : vector<8xf32>
    %9 = vector.multi_reduction <add>, %6, %cst_8 [1] : vector<8x256xf32> to vector<8xf32>
    %10 = vector.shape_cast %9 : vector<8xf32> to vector<8x1xf32>
    %11 = arith.addf %8, %10 : vector<8x1xf32>
    %c0_9 = arith.constant 0 : index
    %c0_10 = arith.constant 0 : index
    %c0_11 = arith.constant 0 : index
    %12 = vector.load %arg4[%c0_9, %c0_10, %c0_11] : memref<1x8x1xf32, #tpu.memory_space<vmem>>, vector<1x8x1xf32>
    %13 = vector.shape_cast %12 : vector<1x8x1xf32> to vector<8x1xf32>
    %14 = vector.shape_cast %11 : vector<8x1xf32> to vector<1x8x1xf32>
    tpu.vector_store %arg4[%c0_9, %c0_10, %c0_11], %14 {strides = array<i32>} : memref<1x8x1xf32, #tpu.memory_space<vmem>>, vector<1x8x1xf32>,
    %c0_12 = arith.constant 0 : index
    %c0_13 = arith.constant 0 : index
    %c0_14 = arith.constant 0 : index
    %15 = vector.load %arg5[%c0_12, %c0_13, %c0_14] : memref<1x8x1xf32, #tpu.memory_space<vmem>>, vector<1x8x1xf32>
    %16 = vector.shape_cast %15 : vector<1x8x1xf32> to vector<8x1xf32>
    %17 = arith.mulf %6, %6 : vector<8x256xf32>
    %cst_15 = arith.constant dense<0.000000e+00> : vector<8xf32>
    %18 = vector.multi_reduction <add>, %17, %cst_15 [1] : vector<8x256xf32> to vector<8xf32>
    %19 = vector.shape_cast %18 : vector<8xf32> to vector<8x1xf32>
    %20 = arith.addf %16, %19 : vector<8x1xf32>
    %c0_16 = arith.constant 0 : index
    %c0_17 = arith.constant 0 : index
    %c0_18 = arith.constant 0 : index
    %21 = vector.load %arg5[%c0_16, %c0_17, %c0_18] : memref<1x8x1xf32, #tpu.memory_space<vmem>>, vector<1x8x1xf32>
    %22 = vector.shape_cast %21 : vector<1x8x1xf32> to vector<8x1xf32>
    %23 = vector.shape_cast %20 : vector<8x1xf32> to vector<1x8x1xf32>
    tpu.vector_store %arg5[%c0_16, %c0_17, %c0_18], %23 {strides = array<i32>} : memref<1x8x1xf32, #tpu.memory_space<vmem>>, vector<1x8x1xf32>,
    return
  }
  func.func @transform_0(%arg0: i32, %arg1: i32) -> (i32, i32, i32) {
    %c0_i32 = arith.constant 0 : i32
    %c0_i32_0 = arith.constant 0 : i32
    return %arg0, %c0_i32, %arg1 : i32, i32, i32
  }
  func.func @transform_1(%arg0: i32, %arg1: i32) -> (i32, i32) {
    %c0_i32 = arith.constant 0 : i32
    %c0_i32_0 = arith.constant 0 : i32
    %c0_i32_1 = arith.constant 0 : i32
    return %c0_i32, %c0_i32_0 : i32, i32
  }
  func.func @transform_2(%arg0: i32, %arg1: i32) -> (i32, i32, i32) {
    %c0_i32 = arith.constant 0 : i32
    %c0_i32_0 = arith.constant 0 : i32
    %c0_i32_1 = arith.constant 0 : i32
    return %arg0, %c0_i32, %c0_i32_0 : i32, i32, i32
  }
  func.func @transform_3(%arg0: i32, %arg1: i32) -> (i32, i32, i32) {
    %c0_i32 = arith.constant 0 : i32
    %c0_i32_0 = arith.constant 0 : i32
    %c0_i32_1 = arith.constant 0 : i32
    return %arg0, %c0_i32, %c0_i32_0 : i32, i32, i32
  }
}

module attributes {stable_mosaic.version = 11 : i64} {
  func.func @_conv_bn_relu_kernel(%arg0: i32, %arg1: i32, %arg2: memref<1x8x256xf32, #tpu.memory_space<vmem>>, %arg3: memref<8x8xf32, #tpu.memory_space<vmem>>, %arg4: memref<8x1xf32, #tpu.memory_space<vmem>>, %arg5: memref<8x1xf32, #tpu.memory_space<vmem>>, %arg6: memref<1x8x256xf32, #tpu.memory_space<vmem>>) attributes {dimension_semantics = [#tpu.dimension_semantics<parallel>, #tpu.dimension_semantics<parallel>], iteration_bounds = array<i64: 2, 1>, scalar_prefetch = 0 : i64, scratch_operands = 0 : i64, tpu.core_type = #tpu.core_type<tc>, window_params = [{transform_indices = @transform_0, window_bounds = array<i64: 1, 8, 256>}, {pipeline_mode = #tpu.pipeline_mode<synchronous>, transform_indices = @transform_1, window_bounds = array<i64: 8, 8>}, {pipeline_mode = #tpu.pipeline_mode<synchronous>, transform_indices = @transform_2, window_bounds = array<i64: 8, 1>}, {pipeline_mode = #tpu.pipeline_mode<synchronous>, transform_indices = @transform_3, window_bounds = array<i64: 8, 1>}, {transform_indices = @transform_4, window_bounds = array<i64: 1, 8, 256>}]} {
    %c0 = arith.constant 0 : index
    %c0_0 = arith.constant 0 : index
    %0 = vector.load %arg3[%c0, %c0_0] : memref<8x8xf32, #tpu.memory_space<vmem>>, vector<8x8xf32>
    %c0_1 = arith.constant 0 : index
    %c0_2 = arith.constant 0 : index
    %c0_3 = arith.constant 0 : index
    %1 = vector.load %arg2[%c0_1, %c0_2, %c0_3] : memref<1x8x256xf32, #tpu.memory_space<vmem>>, vector<1x8x256xf32>
    %2 = vector.shape_cast %1 : vector<1x8x256xf32> to vector<8x256xf32>
    %cst = arith.constant dense<0.000000e+00> : vector<8x256xf32>
    %3 = tpu.matmul %0, %2, %cst {dimension_numbers = #tpu.dot_dimension_numbers<[1], [0], [0], [1], [0, 0, 1, 1], [], []>} : vector<8x8xf32>, vector<8x256xf32>, vector<8x256xf32> -> vector<8x256xf32>
    %c0_4 = arith.constant 0 : index
    %c0_5 = arith.constant 0 : index
    %4 = vector.load %arg4[%c0_4, %c0_5] : memref<8x1xf32, #tpu.memory_space<vmem>>, vector<8x1xf32>
    %5 = vector.broadcast %4 : vector<8x1xf32> to vector<8x256xf32>
    %6 = arith.mulf %3, %5 : vector<8x256xf32>
    %c0_6 = arith.constant 0 : index
    %c0_7 = arith.constant 0 : index
    %7 = vector.load %arg5[%c0_6, %c0_7] : memref<8x1xf32, #tpu.memory_space<vmem>>, vector<8x1xf32>
    %8 = vector.broadcast %7 : vector<8x1xf32> to vector<8x256xf32>
    %9 = arith.addf %6, %8 : vector<8x256xf32>
    %cst_8 = arith.constant 0.000000e+00 : f32
    %10 = vector.broadcast %cst_8 : f32 to vector<8x256xf32>
    %11 = arith.maximumf %9, %10 : vector<8x256xf32>
    %c0_9 = arith.constant 0 : index
    %c0_10 = arith.constant 0 : index
    %c0_11 = arith.constant 0 : index
    %12 = vector.load %arg6[%c0_9, %c0_10, %c0_11] : memref<1x8x256xf32, #tpu.memory_space<vmem>>, vector<1x8x256xf32>
    %13 = vector.shape_cast %12 : vector<1x8x256xf32> to vector<8x256xf32>
    %14 = vector.shape_cast %11 : vector<8x256xf32> to vector<1x8x256xf32>
    tpu.vector_store %arg6[%c0_9, %c0_10, %c0_11], %14 {strides = array<i32>} : memref<1x8x256xf32, #tpu.memory_space<vmem>>, vector<1x8x256xf32>,
    return
  }
  func.func @transform_0(%arg0: i32, %arg1: i32) -> (i32, i32, i32) {
    %c0_i32 = arith.constant 0 : i32
    %c0_i32_0 = arith.constant 0 : i32
    return %arg0, %c0_i32, %arg1 : i32, i32, i32
  }
  func.func @transform_1(%arg0: i32, %arg1: i32) -> (i32, i32) {
    %c0_i32 = arith.constant 0 : i32
    %c0_i32_0 = arith.constant 0 : i32
    %c0_i32_1 = arith.constant 0 : i32
    return %c0_i32, %c0_i32_0 : i32, i32
  }
  func.func @transform_2(%arg0: i32, %arg1: i32) -> (i32, i32) {
    %c0_i32 = arith.constant 0 : i32
    %c0_i32_0 = arith.constant 0 : i32
    %c0_i32_1 = arith.constant 0 : i32
    return %c0_i32, %c0_i32_0 : i32, i32
  }
  func.func @transform_3(%arg0: i32, %arg1: i32) -> (i32, i32) {
    %c0_i32 = arith.constant 0 : i32
    %c0_i32_0 = arith.constant 0 : i32
    %c0_i32_1 = arith.constant 0 : i32
    return %c0_i32, %c0_i32_0 : i32, i32
  }
  func.func @transform_4(%arg0: i32, %arg1: i32) -> (i32, i32, i32) {
    %c0_i32 = arith.constant 0 : i32
    %c0_i32_0 = arith.constant 0 : i32
    return %arg0, %c0_i32, %arg1 : i32, i32, i32
  }
}

</mosaic_0001>

<llo_original>
// kernel: conv1x1_module.2
$region0: #{conv1x1_module.2}
  #allocation0 [shape = 'u32[]', space=smem, size = 0x4, offset = 0x4, fixed_abs, tag = 'smem constant byte address 0x4 - core index']
  #allocation1 [shape = 'u32[72,128]{1,0:T(1,128)}', space=vmem, size = 0x9000, scoped, tag = 'internal scratch']
  %s0 = inlined_call_operand.vmem [shape: f32[2,8,256], index: 0, kind: input, shape index: {}]
  %s1 = inlined_call_operand.vmem [shape: f32[8,8], index: 1, kind: input, shape index: {}]
  %s2 = inlined_call_operand.vmem [shape: f32[2,8,1], index: 2, kind: output, shape index: {0}]
  %s3 = inlined_call_operand.vmem [shape: f32[2,8,1], index: 3, kind: output, shape index: {1}]
  %4 = xla_tuple %s2, %s3
  %s5 = sld [smem:[#allocation0]]
  $region53: #{conv1x1_module.2} parent=0
    _
  %s7 = ssub.s32 1, %s5
  %s8 = scalar_select 0, %s7, %s5
  loop: start=0, step=1, limit=4
  $region2: #{conv1x1_module.2} parent=0 // loop_pre_header
    _
  $region3: #{conv1x1_module.2} parent=0 // loop_header
    %s10 = sphi 0, %s14
    %p11 = scmp.ge.s32.totalorder %s10, 4
    %s17 = sphi 0, %s29
    %s18 = sphi 0, %s25
    %s19 = sphi 0, %s17
    %s20 = sphi 0, %s18
    %s21 = sphi 0, %s19
    %s22 = sphi 0, %s20
    %s34 = sphi 0, %s36
    %s37 = sphi 0, %s34
    %s38 = sphi 0, %s37
    %s54 = sphi 0, %s38
    %s58 = sphi 0, %s58
    %s60 = sphi 0, %s58
    %s61 = sphi 0, %s60
    %s75 = sphi 0, %s61
    %s81 = sphi 0, %s83
    %s84 = sphi 0, %s81
    %s85 = sphi 0, %s84
    %s101 = sphi 0, %s85
    %s107 = sphi 0, %s109
    %s110 = sphi 0, %s107
    %s111 = sphi 0, %s110
    %s127 = sphi 0, %s111
  $region4: #{conv1x1_module.2} parent=0 // loop_header_branch
    %13 = sbr.rel (%p11) target = $region8
  $region5: #{conv1x1_module.2} parent=0 // loop_body
    %s15 = ssub.s32 %s10, 1
    %s16 = ssub.s32 %s10, 2
    %s23 = sadd.s32 1, %s18
    %p24 = scmp.ge.s32.totalorder %s23, 1
    %s25 = scalar_select %p24, 0, %s23
    %s26 = sadd.s32 1, %s17
    %s27 = scalar_select %p24, %s26, %s17
    %p28 = scmp.ge.s32.totalorder %s27, 2
    %s29 = scalar_select %p28, 0, %s27
    %s30 = ssub.s32 %s17, %s29
    %s31 = ssub.s32 %s18, %s25
    %s32 = sor.u32 %s30, %s31
    %p33 = scmp.eq.s32.totalorder %s32, 0
    %s35 = sadd.s32 %s34, 1
    %s36 = scalar_select %p33, %s34, %s35
    %p39 = pneg %p33
    %p40 = scmp.eq.s32.totalorder %s10, 1
    %p41 = por %p39, %p40
    %p42 = scmp.ne.s32.totalorder %s34, %s37
    %p43 = scmp.eq.s32.totalorder %s10, 0
    %p44 = por %p42, %p43
    %p45 = scmp.ne.s32.totalorder %s34, %s37
    %p46 = scmp.eq.s32.totalorder %s15, 1
    %p47 = por %p45, %p46
    %p48 = scmp.ne.s32.totalorder %s37, %s38
    %p49 = scmp.eq.s32.totalorder %s15, 0
    %p50 = por %p48, %p49
    %p51 = scmp.ne.s32.totalorder %s37, %s38
    %p52 = scmp.eq.s32.totalorder %s16, 1
    %p53 = por %p51, %p52
    %p55 = scmp.ne.s32.totalorder %s38, %s54
    %p56 = scmp.eq.s32.totalorder %s16, 0
    %p57 = por %p55, %p56
    %s59 = sadd.s32 %s58, 1
    %p62 = scmp.eq.s32.totalorder %s10, 1
    %p63 = scmp.ne.s32.totalorder %s58, %s60
    %p64 = scmp.eq.s32.totalorder %s10, 0
    %p65 = por %p63, %p64
    %p66 = scmp.ne.s32.totalorder %s58, %s60
    %p67 = scmp.eq.s32.totalorder %s15, 1
    %p68 = por %p66, %p67
    %p69 = scmp.ne.s32.totalorder %s60, %s61
    %p70 = scmp.eq.s32.totalorder %s15, 0
    %p71 = por %p69, %p70
    %p72 = scmp.ne.s32.totalorder %s60, %s61
    %p73 = scmp.eq.s32.totalorder %s16, 1
    %p74 = por %p72, %p73
    %p76 = scmp.ne.s32.totalorder %s61, %s75
    %p77 = scmp.eq.s32.totalorder %s16, 0
    %p78 = por %p76, %p77
    %s79 = ssub.s32 %s17, %s29
    %p80 = scmp.eq.s32.totalorder %s79, 0
    %s82 = sadd.s32 %s81, 1
    %s83 = scalar_select %p80, %s81, %s82
    %p86 = pneg %p80
    %p87 = scmp.eq.s32.totalorder %s10, 1
    %p88 = por %p86, %p87
    %p89 = scmp.ne.s32.totalorder %s81, %s84
    %p90 = scmp.eq.s32.totalorder %s10, 0
    %p91 = por %p89, %p90
    %p92 = scmp.ne.s32.totalorder %s81, %s84
    %p93 = scmp.eq.s32.totalorder %s15, 1
    %p94 = por %p92, %p93
    %p95 = scmp.ne.s32.totalorder %s84, %s85
    %p96 = scmp.eq.s32.totalorder %s15, 0
    %p97 = por %p95, %p96
    %p98 = scmp.ne.s32.totalorder %s84, %s85
    %p99 = scmp.eq.s32.totalorder %s16, 1
    %p100 = por %p98, %p99
    %p102 = scmp.ne.s32.totalorder %s85, %s101
    %p103 = scmp.eq.s32.totalorder %s16, 0
    %p104 = por %p102, %p103
    %s105 = ssub.s32 %s17, %s29
    %p106 = scmp.eq.s32.totalorder %s105, 0
    %s108 = sadd.s32 %s107, 1
    %s109 = scalar_select %p106, %s107, %s108
    %p112 = pneg %p106
    %p113 = scmp.eq.s32.totalorder %s10, 1
    %p114 = por %p112, %p113
    %p115 = scmp.ne.s32.totalorder %s107, %s110
    %p116 = scmp.eq.s32.totalorder %s10, 0
    %p117 = por %p115, %p116
    %p118 = scmp.ne.s32.totalorder %s107, %s110
    %p119 = scmp.eq.s32.totalorder %s15, 1
    %p120 = por %p118, %p119
    %p121 = scmp.ne.s32.totalorder %s110, %s111
    %p122 = scmp.eq.s32.totalorder %s15, 0
    %p123 = por %p121, %p122
    %p124 = scmp.ne.s32.totalorder %s110, %s111
    %p125 = scmp.eq.s32.totalorder %s16, 1
    %p126 = por %p124, %p125
    %p128 = scmp.ne.s32.totalorder %s111, %s127
    %p129 = scmp.eq.s32.totalorder %s16, 0
    %p130 = por %p128, %p129
    %p131 = scmp.le.s32.totalorder 1, %s10
    %p132 = scmp.lt.s32.totalorder %s10, 3
    %p133 = pnand %p131, %p132
    %p134 = pneg %p133
    // Predicated region
    $region9: #{conv1x1_module.2} parent=5 // pred_check
      _
    $region10: #{conv1x1_module.2} parent=5 // pred_check_branch
      %136 = sbr.rel (%p133) target = $region12
    $region11: #{conv1x1_module.2} parent=5 // pred_region
      %s137 = ssub.s32 %s10, 1
      // Predicated region
      $region13: #{conv1x1_module.2} parent=11 // pred_check
        %p138 = pneg %p71
      $region14: #{conv1x1_module.2} parent=11 // pred_check_branch
        %140 = sbr.rel (%p138) target = $region16
      $region15: #{conv1x1_module.2} parent=11 // pred_region
        _
      $region16: #{conv1x1_module.2} parent=11 // pred_fallthru
        _
    $region12: #{conv1x1_module.2} parent=5 // pred_fallthru
      _
    %p141 = scmp.lt.s32.totalorder %s10, 2
    // Predicated region
    $region17: #{conv1x1_module.2} parent=5 // pred_check
      %p142 = pneg %p141
    $region18: #{conv1x1_module.2} parent=5 // pred_check_branch
      %144 = sbr.rel (%p142) target = $region20
    $region19: #{conv1x1_module.2} parent=5 // pred_region
      // Predicated region
      $region21: #{conv1x1_module.2} parent=19 // pred_check
        %p145 = pneg %p44
      $region22: #{conv1x1_module.2} parent=19 // pred_check_branch
        %147 = sbr.rel (%p145) target = $region24
      $region23: #{conv1x1_module.2} parent=19 // pred_region
        %s148 = smul.u32 2, %s18
        %p149 = scmp.lt.s32.totalorder %s17, 1
        %s150 = scalar_select %p149, %s17, 1
        %p151 = scmp.lt.s32.totalorder %s148, 1
        %s152 = scalar_select %p151, %s148, 1
        %s153 = smul.addr %s150, 2
        %s154 = sadd.s32 %s152, %s153
        %s155 = smul.addr %s154, 8
        %s156 = scalar_lea.vmem %s0, %s155
        %s157 = smul.u32 2, %s18
      $region24: #{conv1x1_module.2} parent=19 // pred_fallthru
        _
    $region20: #{conv1x1_module.2} parent=5 // pred_fallthru
      _
    %p158 = scmp.le.s32.totalorder 1, %s10
    %p159 = scmp.lt.s32.totalorder %s10, 3
    %p160 = pnand %p158, %p159
    %p161 = pneg %p160
    // Predicated region
    $region25: #{conv1x1_module.2} parent=5 // pred_check
      _
    $region26: #{conv1x1_module.2} parent=5 // pred_check_branch
      %163 = sbr.rel (%p160) target = $region28
    $region27: #{conv1x1_module.2} parent=5 // pred_region
      %s164 = ssub.s32 %s10, 1
      %s165 = smul.u32 2, %s20
      %p166 = scmp.lt.s32.totalorder %s19, 1
      %s167 = scalar_select %p166, %s19, 1
      %p168 = scmp.lt.s32.totalorder %s165, 1
      %s169 = scalar_select %p168, %s165, 1
      %s170 = smul.addr %s167, 2
      %s171 = sadd.s32 %s169, %s170
      %s172 = smul.addr %s171, 8
      %s173 = scalar_lea.vmem %s0, %s172
      %p174 = pneg %p50
      %p175 = pneg %p47
      %p176 = pneg %p71
      %p177 = pneg %p68
      %p178 = pneg %p97
      %p179 = pneg %p94
      %p180 = scmp.lt.s32.totalorder %s19, 1
      %s181 = scalar_select %p180, %s19, 1
      %s182 = smul.addr %s181, 8
      %s183 = scalar_lea.vmem %s2, %s182
      %p184 = pneg %p123
      %p185 = pneg %p120
      %p186 = scmp.lt.s32.totalorder %s19, 1
      %s187 = scalar_select %p186, %s19, 1
      %s188 = smul.addr %s187, 8
      %s189 = scalar_lea.vmem %s3, %s188
      %s190 = smul.u32 2, %s20
      %p191 = scmp.lt.s32.totalorder %s19, 1
      %s192 = scalar_select %p191, %s19, 1
      %p193 = scmp.lt.s32.totalorder %s190, 1
      %s194 = scalar_select %p193, %s190, 1
      %s195 = smul.addr %s192, 2
      %s196 = sadd.s32 %s194, %s195
      %s197 = smul.addr %s196, 8
      %s198 = scalar_lea.vmem %s0, %s197
      %s199 = smul.u32 2, %s20
      %p200 = scmp.lt.s32.totalorder %s19, 1
      %s201 = scalar_select %p200, %s19, 1
      %s202 = smul.addr %s201, 8
      %s203 = scalar_lea.vmem %s2, %s202
      %p204 = scmp.lt.s32.totalorder %s19, 1
      %s205 = scalar_select %p204, %s19, 1
      %s206 = smul.addr %s205, 8
      %s207 = scalar_lea.vmem %s3, %s206
      %p208 = scmp.eq.s32.totalorder %s20, 0
      // Predicated region
      $region29: #{conv1x1_module.2} parent=27 // pred_check
        %p209 = pneg %p208
      $region30: #{conv1x1_module.2} parent=27 // pred_check_branch
        %211 = sbr.rel (%p209) target = $region32
      $region31: #{conv1x1_module.2} parent=27 // pred_region
        %vm212 = vcmask 7168
        %213 = vst.msk [vmem:[%s203] sm:$0xff] %vm212, 0.0
        %214 = vst.msk [vmem:[%s207] sm:$0xff] %vm212, 0.0
      $region32: #{conv1x1_module.2} parent=27 // pred_fallthru
        _
      %v215 = vld [vmem:[%s1] sm:$0xff]
      %v216 = vld [vmem:[%s198] sm:$0xff]
      %v217 = vld [vmem:[%s198 + $0x8] sm:$0xff]
      %vm218 = vcmask 64512
      %v220 = vsel %vm218, %v215, 0
      %222 = vmatpush.msra.mxu0 0.0
      %223 = vmatpush.msra.mxu0 0.0
      %224 = vmatpush.msra.mxu0 0.0
      %225 = vmatpush.msra.mxu0 0.0
      %226 = vmatpush.msra.mxu0 0.0
      %227 = vmatpush.msra.mxu0 0.0
      %228 = vmatpush.msra.mxu0 0.0
      %229 = vmatpush.msra.mxu0 0.0
      %230 = vmatpush.msra.mxu0 0.0
      %231 = vmatpush.msra.mxu0 0.0
      %232 = vmatpush.msra.mxu0 0.0
      %233 = vmatpush.msra.mxu0 0.0
      %234 = vmatpush.msra.mxu0 0.0
      %235 = vmatpush.msra.mxu0 0.0
      %236 = vmatpush.msra.mxu0 0.0
      %237 = vmatpush.msra.mxu0 %v216
      %238 = vmatmul.f32.gmra.mxu0 %v220
      %v239 = vpop.f32.mrf.mxu0
      %v240 = vadd.f32 0.0, %v239
      %241 = vdwg.mxu0
      %242 = vmatpush.msra.mxu0 0.0
      %243 = vmatpush.msra.mxu0 0.0
      %244 = vmatpush.msra.mxu0 0.0
      %245 = vmatpush.msra.mxu0 0.0
      %246 = vmatpush.msra.mxu0 0.0
      %247 = vmatpush.msra.mxu0 0.0
      %248 = vmatpush.msra.mxu0 0.0
      %249 = vmatpush.msra.mxu0 0.0
      %250 = vmatpush.msra.mxu0 0.0
      %251 = vmatpush.msra.mxu0 0.0
      %252 = vmatpush.msra.mxu0 0.0
      %253 = vmatpush.msra.mxu0 0.0
      %254 = vmatpush.msra.mxu0 0.0
      %255 = vmatpush.msra.mxu0 0.0
      %256 = vmatpush.msra.mxu0 0.0
      %257 = vmatpush.msra.mxu0 %v217
      %258 = vmatmul.f32.gmra.mxu0 %v220
      %v259 = vpop.f32.mrf.mxu0
      %v260 = vadd.f32 0.0, %v259
      %261 = vdwg.mxu0
      %v262 = vld [vmem:[%s203] sm:$0xff]
      %v263 = vadd.f32 %v240, %v260
      %264 = vadd.xlane.f32.xlu0 %v263
      %v265 = vpop.xlane.xlu0 %264
      %v266 = vadd.f32 %v262, %v265
      %vm267 = vcmask 7168
      %268 = vst.msk [vmem:[%s203] sm:$0xff] %vm267, %v266
      %v269 = vld [vmem:[%s207] sm:$0xff]
      %v270 = vmul.f32 %v240, %v240
      %v271 = vmul.f32 %v260, %v260
      %v272 = vadd.f32 %v270, %v271
      %273 = vadd.xlane.f32.xlu0 %v272
      %v274 = vpop.xlane.xlu0 %273
      %v275 = vadd.f32 %v269, %v274
      %276 = vst.msk [vmem:[%s207] sm:$0xff] %vm267, %v275
      %p277 = scmp.lt.s32.totalorder %s19, 1
      %s278 = scalar_select %p277, %s19, 1
      %s279 = smul.addr %s278, 8
      %s280 = scalar_lea.vmem %s2, %s279
      %p281 = scmp.lt.s32.totalorder %s19, 1
      %s282 = scalar_select %p281, %s19, 1
      %s283 = smul.addr %s282, 8
      %s284 = scalar_lea.vmem %s3, %s283
      // Predicated region
      $region33: #{conv1x1_module.2} parent=27 // pred_check
        %p285 = pneg %p94
      $region34: #{conv1x1_module.2} parent=27 // pred_check_branch
        %287 = sbr.rel (%p285) target = $region36
      $region35: #{conv1x1_module.2} parent=27 // pred_region
        _
      $region36: #{conv1x1_module.2} parent=27 // pred_fallthru
        _
      // Predicated region
      $region37: #{conv1x1_module.2} parent=27 // pred_check
        %p288 = pneg %p120
      $region38: #{conv1x1_module.2} parent=27 // pred_check_branch
        %290 = sbr.rel (%p288) target = $region40
      $region39: #{conv1x1_module.2} parent=27 // pred_region
        _
      $region40: #{conv1x1_module.2} parent=27 // pred_fallthru
        _
    $region28: #{conv1x1_module.2} parent=5 // pred_fallthru
      _
    %p291 = scmp.le.s32.totalorder 2, %s10
    // Predicated region
    $region41: #{conv1x1_module.2} parent=5 // pred_check
      %p292 = pneg %p291
    $region42: #{conv1x1_module.2} parent=5 // pred_check_branch
      %294 = sbr.rel (%p292) target = $region44
    $region43: #{conv1x1_module.2} parent=5 // pred_region
      %s295 = ssub.s32 %s10, 2
      // Predicated region
      $region45: #{conv1x1_module.2} parent=43 // pred_check
        %p296 = pneg %p100
      $region46: #{conv1x1_module.2} parent=43 // pred_check_branch
        %298 = sbr.rel (%p296) target = $region48
      $region47: #{conv1x1_module.2} parent=43 // pred_region
        %p299 = scmp.lt.s32.totalorder %s21, 1
        %s300 = scalar_select %p299, %s21, 1
        %s301 = smul.addr %s300, 8
        %s302 = scalar_lea.vmem %s2, %s301
      $region48: #{conv1x1_module.2} parent=43 // pred_fallthru
        _
      // Predicated region
      $region49: #{conv1x1_module.2} parent=43 // pred_check
        %p303 = pneg %p126
      $region50: #{conv1x1_module.2} parent=43 // pred_check_branch
        %305 = sbr.rel (%p303) target = $region52
      $region51: #{conv1x1_module.2} parent=43 // pred_region
        %p306 = scmp.lt.s32.totalorder %s21, 1
        %s307 = scalar_select %p306, %s21, 1
        %s308 = smul.addr %s307, 8
        %s309 = scalar_lea.vmem %s3, %s308
      $region52: #{conv1x1_module.2} parent=43 // pred_fallthru
        _
    $region44: #{conv1x1_module.2} parent=5 // pred_fallthru
      _
  $region6: #{conv1x1_module.2} parent=0 // loop_footer
    %s14 = sadd.s32 1, %s10
  $region7: #{conv1x1_module.2} parent=0 // loop_footer_branch
    %9 = sbr.rel target = $region3
  $region8: #{conv1x1_module.2} parent=0 // loop_exit
    _

// kernel: conv1x1_module.3
$region0: #{conv1x1_module.3}
  #allocation0 [shape = 'u32[]', space=smem, size = 0x4, offset = 0x4, fixed_abs, tag = 'smem constant byte address 0x4 - core index']
  #allocation1 [shape = 'u32[72,128]{1,0:T(1,128)}', space=vmem, size = 0x9000, scoped, tag = 'internal scratch']
  %s0 = inlined_call_operand.vmem [shape: f32[2,8,256], index: 0, kind: input, shape index: {}]
  %s1 = inlined_call_operand.vmem [shape: f32[8,8], index: 1, kind: input, shape index: {}]
  %s2 = inlined_call_operand.vmem [shape: f32[8,1], index: 2, kind: input, shape index: {}]
  %s3 = inlined_call_operand.vmem [shape: f32[8,1], index: 3, kind: input, shape index: {}]
  %s4 = inlined_call_operand.vmem [shape: f32[2,8,256], index: 4, kind: output, shape index: {}]
  %s5 = sld [smem:[#allocation0]]
  $region49: #{conv1x1_module.3} parent=0
    _
  %s7 = ssub.s32 1, %s5
  %s8 = scalar_select 0, %s7, %s5
  loop: start=0, step=1, limit=4
  $region2: #{conv1x1_module.3} parent=0 // loop_pre_header
    _
  $region3: #{conv1x1_module.3} parent=0 // loop_header
    %s10 = sphi 0, %s14
    %p11 = scmp.ge.s32.totalorder %s10, 4
    %s17 = sphi 0, %s29
    %s18 = sphi 0, %s25
    %s19 = sphi 0, %s17
    %s20 = sphi 0, %s18
    %s21 = sphi 0, %s19
    %s22 = sphi 0, %s20
    %s34 = sphi 0, %s36
    %s37 = sphi 0, %s34
    %s38 = sphi 0, %s37
    %s54 = sphi 0, %s38
    %s58 = sphi 0, %s58
    %s60 = sphi 0, %s58
    %s61 = sphi 0, %s60
    %s75 = sphi 0, %s61
    %s79 = sphi 0, %s79
    %s81 = sphi 0, %s79
    %s82 = sphi 0, %s81
    %s96 = sphi 0, %s82
    %s100 = sphi 0, %s100
    %s102 = sphi 0, %s100
    %s103 = sphi 0, %s102
    %s117 = sphi 0, %s103
    %s125 = sphi 0, %s127
    %s128 = sphi 0, %s125
    %s129 = sphi 0, %s128
    %s145 = sphi 0, %s129
  $region4: #{conv1x1_module.3} parent=0 // loop_header_branch
    %13 = sbr.rel (%p11) target = $region8
  $region5: #{conv1x1_module.3} parent=0 // loop_body
    %s15 = ssub.s32 %s10, 1
    %s16 = ssub.s32 %s10, 2
    %s23 = sadd.s32 1, %s18
    %p24 = scmp.ge.s32.totalorder %s23, 1
    %s25 = scalar_select %p24, 0, %s23
    %s26 = sadd.s32 1, %s17
    %s27 = scalar_select %p24, %s26, %s17
    %p28 = scmp.ge.s32.totalorder %s27, 2
    %s29 = scalar_select %p28, 0, %s27
    %s30 = ssub.s32 %s17, %s29
    %s31 = ssub.s32 %s18, %s25
    %s32 = sor.u32 %s30, %s31
    %p33 = scmp.eq.s32.totalorder %s32, 0
    %s35 = sadd.s32 %s34, 1
    %s36 = scalar_select %p33, %s34, %s35
    %p39 = pneg %p33
    %p40 = scmp.eq.s32.totalorder %s10, 1
    %p41 = por %p39, %p40
    %p42 = scmp.ne.s32.totalorder %s34, %s37
    %p43 = scmp.eq.s32.totalorder %s10, 0
    %p44 = por %p42, %p43
    %p45 = scmp.ne.s32.totalorder %s34, %s37
    %p46 = scmp.eq.s32.totalorder %s15, 1
    %p47 = por %p45, %p46
    %p48 = scmp.ne.s32.totalorder %s37, %s38
    %p49 = scmp.eq.s32.totalorder %s15, 0
    %p50 = por %p48, %p49
    %p51 = scmp.ne.s32.totalorder %s37, %s38
    %p52 = scmp.eq.s32.totalorder %s16, 1
    %p53 = por %p51, %p52
    %p55 = scmp.ne.s32.totalorder %s38, %s54
    %p56 = scmp.eq.s32.totalorder %s16, 0
    %p57 = por %p55, %p56
    %s59 = sadd.s32 %s58, 1
    %p62 = scmp.eq.s32.totalorder %s10, 1
    %p63 = scmp.ne.s32.totalorder %s58, %s60
    %p64 = scmp.eq.s32.totalorder %s10, 0
    %p65 = por %p63, %p64
    %p66 = scmp.ne.s32.totalorder %s58, %s60
    %p67 = scmp.eq.s32.totalorder %s15, 1
    %p68 = por %p66, %p67
    %p69 = scmp.ne.s32.totalorder %s60, %s61
    %p70 = scmp.eq.s32.totalorder %s15, 0
    %p71 = por %p69, %p70
    %p72 = scmp.ne.s32.totalorder %s60, %s61
    %p73 = scmp.eq.s32.totalorder %s16, 1
    %p74 = por %p72, %p73
    %p76 = scmp.ne.s32.totalorder %s61, %s75
    %p77 = scmp.eq.s32.totalorder %s16, 0
    %p78 = por %p76, %p77
    %s80 = sadd.s32 %s79, 1
    %p83 = scmp.eq.s32.totalorder %s10, 1
    %p84 = scmp.ne.s32.totalorder %s79, %s81
    %p85 = scmp.eq.s32.totalorder %s10, 0
    %p86 = por %p84, %p85
    %p87 = scmp.ne.s32.totalorder %s79, %s81
    %p88 = scmp.eq.s32.totalorder %s15, 1
    %p89 = por %p87, %p88
    %p90 = scmp.ne.s32.totalorder %s81, %s82
    %p91 = scmp.eq.s32.totalorder %s15, 0
    %p92 = por %p90, %p91
    %p93 = scmp.ne.s32.totalorder %s81, %s82
    %p94 = scmp.eq.s32.totalorder %s16, 1
    %p95 = por %p93, %p94
    %p97 = scmp.ne.s32.totalorder %s82, %s96
    %p98 = scmp.eq.s32.totalorder %s16, 0
    %p99 = por %p97, %p98
    %s101 = sadd.s32 %s100, 1
    %p104 = scmp.eq.s32.totalorder %s10, 1
    %p105 = scmp.ne.s32.totalorder %s100, %s102
    %p106 = scmp.eq.s32.totalorder %s10, 0
    %p107 = por %p105, %p106
    %p108 = scmp.ne.s32.totalorder %s100, %s102
    %p109 = scmp.eq.s32.totalorder %s15, 1
    %p110 = por %p108, %p109
    %p111 = scmp.ne.s32.totalorder %s102, %s103
    %p112 = scmp.eq.s32.totalorder %s15, 0
    %p113 = por %p111, %p112
    %p114 = scmp.ne.s32.totalorder %s102, %s103
    %p115 = scmp.eq.s32.totalorder %s16, 1
    %p116 = por %p114, %p115
    %p118 = scmp.ne.s32.totalorder %s103, %s117
    %p119 = scmp.eq.s32.totalorder %s16, 0
    %p120 = por %p118, %p119
    %s121 = ssub.s32 %s17, %s29
    %s122 = ssub.s32 %s18, %s25
    %s123 = sor.u32 %s121, %s122
    %p124 = scmp.eq.s32.totalorder %s123, 0
    %s126 = sadd.s32 %s125, 1
    %s127 = scalar_select %p124, %s125, %s126
    %p130 = pneg %p124
    %p131 = scmp.eq.s32.totalorder %s10, 1
    %p132 = por %p130, %p131
    %p133 = scmp.ne.s32.totalorder %s125, %s128
    %p134 = scmp.eq.s32.totalorder %s10, 0
    %p135 = por %p133, %p134
    %p136 = scmp.ne.s32.totalorder %s125, %s128
    %p137 = scmp.eq.s32.totalorder %s15, 1
    %p138 = por %p136, %p137
    %p139 = scmp.ne.s32.totalorder %s128, %s129
    %p140 = scmp.eq.s32.totalorder %s15, 0
    %p141 = por %p139, %p140
    %p142 = scmp.ne.s32.totalorder %s128, %s129
    %p143 = scmp.eq.s32.totalorder %s16, 1
    %p144 = por %p142, %p143
    %p146 = scmp.ne.s32.totalorder %s129, %s145
    %p147 = scmp.eq.s32.totalorder %s16, 0
    %p148 = por %p146, %p147
    %p149 = scmp.le.s32.totalorder 1, %s10
    %p150 = scmp.lt.s32.totalorder %s10, 3
    %p151 = pnand %p149, %p150
    %p152 = pneg %p151
    // Predicated region
    $region9: #{conv1x1_module.3} parent=5 // pred_check
      _
    $region10: #{conv1x1_module.3} parent=5 // pred_check_branch
      %154 = sbr.rel (%p151) target = $region12
    $region11: #{conv1x1_module.3} parent=5 // pred_region
      %s155 = ssub.s32 %s10, 1
      // Predicated region
      $region13: #{conv1x1_module.3} parent=11 // pred_check
        %p156 = pneg %p71
      $region14: #{conv1x1_module.3} parent=11 // pred_check_branch
        %158 = sbr.rel (%p156) target = $region16
      $region15: #{conv1x1_module.3} parent=11 // pred_region
        _
      $region16: #{conv1x1_module.3} parent=11 // pred_fallthru
        _
      // Predicated region
      $region17: #{conv1x1_module.3} parent=11 // pred_check
        %p159 = pneg %p92
      $region18: #{conv1x1_module.3} parent=11 // pred_check_branch
        %161 = sbr.rel (%p159) target = $region20
      $region19: #{conv1x1_module.3} parent=11 // pred_region
        _
      $region20: #{conv1x1_module.3} parent=11 // pred_fallthru
        _
      // Predicated region
      $region21: #{conv1x1_module.3} parent=11 // pred_check
        %p162 = pneg %p113
      $region22: #{conv1x1_module.3} parent=11 // pred_check_branch
        %164 = sbr.rel (%p162) target = $region24
      $region23: #{conv1x1_module.3} parent=11 // pred_region
        _
      $region24: #{conv1x1_module.3} parent=11 // pred_fallthru
        _
    $region12: #{conv1x1_module.3} parent=5 // pred_fallthru
      _
    %p165 = scmp.lt.s32.totalorder %s10, 2
    // Predicated region
    $region25: #{conv1x1_module.3} parent=5 // pred_check
      %p166 = pneg %p165
    $region26: #{conv1x1_module.3} parent=5 // pred_check_branch
      %168 = sbr.rel (%p166) target = $region28
    $region27: #{conv1x1_module.3} parent=5 // pred_region
      // Predicated region
      $region29: #{conv1x1_module.3} parent=27 // pred_check
        %p169 = pneg %p44
      $region30: #{conv1x1_module.3} parent=27 // pred_check_branch
        %171 = sbr.rel (%p169) target = $region32
      $region31: #{conv1x1_module.3} parent=27 // pred_region
        %s172 = smul.u32 2, %s18
        %p173 = scmp.lt.s32.totalorder %s17, 1
        %s174 = scalar_select %p173, %s17, 1
        %p175 = scmp.lt.s32.totalorder %s172, 1
        %s176 = scalar_select %p175, %s172, 1
        %s177 = smul.addr %s174, 2
        %s178 = sadd.s32 %s176, %s177
        %s179 = smul.addr %s178, 8
        %s180 = scalar_lea.vmem %s0, %s179
        %s181 = smul.u32 2, %s18
      $region32: #{conv1x1_module.3} parent=27 // pred_fallthru
        _
    $region28: #{conv1x1_module.3} parent=5 // pred_fallthru
      _
    %p182 = scmp.le.s32.totalorder 1, %s10
    %p183 = scmp.lt.s32.totalorder %s10, 3
    %p184 = pnand %p182, %p183
    %p185 = pneg %p184
    // Predicated region
    $region33: #{conv1x1_module.3} parent=5 // pred_check
      _
    $region34: #{conv1x1_module.3} parent=5 // pred_check_branch
      %187 = sbr.rel (%p184) target = $region36
    $region35: #{conv1x1_module.3} parent=5 // pred_region
      %s188 = ssub.s32 %s10, 1
      %s189 = smul.u32 2, %s20
      %p190 = scmp.lt.s32.totalorder %s19, 1
      %s191 = scalar_select %p190, %s19, 1
      %p192 = scmp.lt.s32.totalorder %s189, 1
      %s193 = scalar_select %p192, %s189, 1
      %s194 = smul.addr %s191, 2
      %s195 = sadd.s32 %s193, %s194
      %s196 = smul.addr %s195, 8
      %s197 = scalar_lea.vmem %s0, %s196
      %p198 = pneg %p50
      %p199 = pneg %p47
      %p200 = pneg %p71
      %p201 = pneg %p68
      %p202 = pneg %p92
      %p203 = pneg %p89
      %p204 = pneg %p113
      %p205 = pneg %p110
      %p206 = pneg %p141
      %p207 = pneg %p138
      %s208 = smul.u32 2, %s20
      %p209 = scmp.lt.s32.totalorder %s19, 1
      %s210 = scalar_select %p209, %s19, 1
      %p211 = scmp.lt.s32.totalorder %s208, 1
      %s212 = scalar_select %p211, %s208, 1
      %s213 = smul.addr %s210, 2
      %s214 = sadd.s32 %s212, %s213
      %s215 = smul.addr %s214, 8
      %s216 = scalar_lea.vmem %s4, %s215
      %s217 = smul.u32 2, %s20
      %p218 = scmp.lt.s32.totalorder %s19, 1
      %s219 = scalar_select %p218, %s19, 1
      %p220 = scmp.lt.s32.totalorder %s217, 1
      %s221 = scalar_select %p220, %s217, 1
      %s222 = smul.addr %s219, 2
      %s223 = sadd.s32 %s221, %s222
      %s224 = smul.addr %s223, 8
      %s225 = scalar_lea.vmem %s0, %s224
      %s226 = smul.u32 2, %s20
      %s227 = smul.u32 2, %s20
      %p228 = scmp.lt.s32.totalorder %s19, 1
      %s229 = scalar_select %p228, %s19, 1
      %p230 = scmp.lt.s32.totalorder %s227, 1
      %s231 = scalar_select %p230, %s227, 1
      %s232 = smul.addr %s229, 2
      %s233 = sadd.s32 %s231, %s232
      %s234 = smul.addr %s233, 8
      %s235 = scalar_lea.vmem %s4, %s234
      %s236 = smul.u32 2, %s20
      %v237 = vld [vmem:[%s1] sm:$0xff]
      %v238 = vld [vmem:[%s225] sm:$0xff]
      %v239 = vld [vmem:[%s225 + $0x8] sm:$0xff]
      %vm240 = vcmask 64512
      %v242 = vsel %vm240, %v237, 0
      %244 = vmatpush.msra.mxu0 0.0
      %245 = vmatpush.msra.mxu0 0.0
      %246 = vmatpush.msra.mxu0 0.0
      %247 = vmatpush.msra.mxu0 0.0
      %248 = vmatpush.msra.mxu0 0.0
      %249 = vmatpush.msra.mxu0 0.0
      %250 = vmatpush.msra.mxu0 0.0
      %251 = vmatpush.msra.mxu0 0.0
      %252 = vmatpush.msra.mxu0 0.0
      %253 = vmatpush.msra.mxu0 0.0
      %254 = vmatpush.msra.mxu0 0.0
      %255 = vmatpush.msra.mxu0 0.0
      %256 = vmatpush.msra.mxu0 0.0
      %257 = vmatpush.msra.mxu0 0.0
      %258 = vmatpush.msra.mxu0 0.0
      %259 = vmatpush.msra.mxu0 %v238
      %260 = vmatmul.f32.gmra.mxu0 %v242
      %v261 = vpop.f32.mrf.mxu0
      %v262 = vadd.f32 0.0, %v261
      %263 = vdwg.mxu0
      %264 = vmatpush.msra.mxu0 0.0
      %265 = vmatpush.msra.mxu0 0.0
      %266 = vmatpush.msra.mxu0 0.0
      %267 = vmatpush.msra.mxu0 0.0
      %268 = vmatpush.msra.mxu0 0.0
      %269 = vmatpush.msra.mxu0 0.0
      %270 = vmatpush.msra.mxu0 0.0
      %271 = vmatpush.msra.mxu0 0.0
      %272 = vmatpush.msra.mxu0 0.0
      %273 = vmatpush.msra.mxu0 0.0
      %274 = vmatpush.msra.mxu0 0.0
      %275 = vmatpush.msra.mxu0 0.0
      %276 = vmatpush.msra.mxu0 0.0
      %277 = vmatpush.msra.mxu0 0.0
      %278 = vmatpush.msra.mxu0 0.0
      %279 = vmatpush.msra.mxu0 %v239
      %280 = vmatmul.f32.gmra.mxu0 %v242
      %v281 = vpop.f32.mrf.mxu0
      %v282 = vadd.f32 0.0, %v281
      %283 = vdwg.mxu0
      %v284 = vld [vmem:[%s2] sm:$0xff]
      %286 = vset.pattern.permute.xlu0 0
      %287 = vperm.xlu0 %286, %v284
      %v288 = vpop.permute.xlu0 %287
      %v290 = vmul.f32 %v262, %v288
      %v291 = vmul.f32 %v282, %v288
      %v292 = vld [vmem:[%s3] sm:$0xff]
      %294 = vset.pattern.permute.xlu0 0
      %295 = vperm.xlu0 %294, %v292
      %v296 = vpop.permute.xlu0 %295
      %v298 = vadd.f32 %v290, %v296
      %v299 = vadd.f32 %v291, %v296
      %v300 = vmax.f32 %v298, 0.0
      %v301 = vmax.f32 %v299, 0.0
      %302 = vst [vmem:[%s235] sm:$0xff] %v300
      %303 = vst [vmem:[%s235 + $0x8] sm:$0xff] %v301
      %s304 = smul.u32 2, %s20
      %p305 = scmp.lt.s32.totalorder %s19, 1
      %s306 = scalar_select %p305, %s19, 1
      %p307 = scmp.lt.s32.totalorder %s304, 1
      %s308 = scalar_select %p307, %s304, 1
      %s309 = smul.addr %s306, 2
      %s310 = sadd.s32 %s308, %s309
      %s311 = smul.addr %s310, 8
      %s312 = scalar_lea.vmem %s4, %s311
      // Predicated region
      $region37: #{conv1x1_module.3} parent=35 // pred_check
        %p313 = pneg %p138
      $region38: #{conv1x1_module.3} parent=35 // pred_check_branch
        %315 = sbr.rel (%p313) target = $region40
      $region39: #{conv1x1_module.3} parent=35 // pred_region
        %s316 = smul.u32 2, %s20
      $region40: #{conv1x1_module.3} parent=35 // pred_fallthru
        _
    $region36: #{conv1x1_module.3} parent=5 // pred_fallthru
      _
    %p317 = scmp.le.s32.totalorder 2, %s10
    // Predicated region
    $region41: #{conv1x1_module.3} parent=5 // pred_check
      %p318 = pneg %p317
    $region42: #{conv1x1_module.3} parent=5 // pred_check_branch
      %320 = sbr.rel (%p318) target = $region44
    $region43: #{conv1x1_module.3} parent=5 // pred_region
      %s321 = ssub.s32 %s10, 2
      // Predicated region
      $region45: #{conv1x1_module.3} parent=43 // pred_check
        %p322 = pneg %p144
      $region46: #{conv1x1_module.3} parent=43 // pred_check_branch
        %324 = sbr.rel (%p322) target = $region48
      $region47: #{conv1x1_module.3} parent=43 // pred_region
        %s325 = smul.u32 2, %s22
        %p326 = scmp.lt.s32.totalorder %s21, 1
        %s327 = scalar_select %p326, %s21, 1
        %p328 = scmp.lt.s32.totalorder %s325, 1
        %s329 = scalar_select %p328, %s325, 1
        %s330 = smul.addr %s327, 2
        %s331 = sadd.s32 %s329, %s330
        %s332 = smul.addr %s331, 8
        %s333 = scalar_lea.vmem %s4, %s332
      $region48: #{conv1x1_module.3} parent=43 // pred_fallthru
        _
    $region44: #{conv1x1_module.3} parent=5 // pred_fallthru
      _
  $region6: #{conv1x1_module.3} parent=0 // loop_footer
    %s14 = sadd.s32 1, %s10
  $region7: #{conv1x1_module.3} parent=0 // loop_footer_branch
    %9 = sbr.rel target = $region3
  $region8: #{conv1x1_module.3} parent=0 // loop_exit
    _

</llo_original>
